<compile_context>
chip_gen: v6e
topology: v6e:2x2x1
jax: 0.10.0
libtpu: 0.0.40
codegen_flags: <defaults>
</compile_context>

<pallas_src>
import functools

import jax
import jax.numpy as jnp
from jax.experimental import pallas as pl
from jax.experimental.pallas import tpu as pltpu


def _atanh_kernel(x_ref, o_ref, *, eps):
    x = x_ref[...].astype(jnp.float32)          # upcast for accurate EUP log path
    x = jnp.clip(x, -1.0 + eps, 1.0 - eps)      # clamp, same semantics as torch.clamp
    # atanh(x) = 0.5 * (log(1 + x) - log(1 - x))
    y = 0.5 * (jnp.log(1.0 + x) - jnp.log(1.0 - x))
    o_ref[...] = y.astype(o_ref.dtype)


def atanh_pallas(x, eps=1e-8, *, target_block_bytes=2 * 1024 * 1024):
    """Elementwise clamped atanh, matching ATanh.forward semantics."""
    orig_shape = x.shape
    orig_dtype = x.dtype
    n = x.size
    if n == 0:
        return x

    itemsize = jnp.dtype(orig_dtype).itemsize
    sublane = max(8, 32 // itemsize)            # 8 for f32, 16 for bf16, 32 for int8

    flat = x.reshape(-1)

    # Pick the widest lane dim (multiple of 128) that divides n exactly so no
    # pad/slice passes are needed; prefer one that also gives >= 8 rows.
    lanes = None
    for cand in (2048, 1024, 512, 256, 128):
        if n % cand == 0 and n // cand >= 8:
            lanes = cand
            break
    if lanes is None:
        for cand in (2048, 1024, 512, 256, 128):
            if n % cand == 0:
                lanes = cand
                break

    padded = False
    if lanes is None:
        # numel not a multiple of 128: pad just to the next lane multiple.
        lanes = 128
        rows = pl.cdiv(n, lanes)
        flat = jnp.pad(flat, (0, rows * lanes - n))
        padded = True
    else:
        rows = n // lanes

    x2d = flat.reshape(rows, lanes)

    # Row tile: ~target_block_bytes of input per grid step, sublane-aligned,
    # or the whole row extent if the array is small (full dims are always legal).
    row_tile = max(1, target_block_bytes // (lanes * itemsize))
    if row_tile >= rows:
        row_tile = rows
    else:
        row_tile = max(sublane, (row_tile // sublane) * sublane)

    grid = (pl.cdiv(rows, row_tile),)

    out2d = pl.pallas_call(
        functools.partial(_atanh_kernel, eps=eps),
        out_shape=jax.ShapeDtypeStruct((rows, lanes), orig_dtype),
        grid=grid,
        in_specs=[pl.BlockSpec((row_tile, lanes), lambda i: (i, 0))],
        out_specs=pl.BlockSpec((row_tile, lanes), lambda i: (i, 0)),
        compiler_params=pltpu.CompilerParams(
            dimension_semantics=("parallel",)),
    )(x2d)

    out_flat = out2d.reshape(-1)
    if padded:
        out_flat = out_flat[:n]
    return out_flat.reshape(orig_shape)


if __name__ == "__main__":
    key = jax.random.PRNGKey(0)
    # batch=2, channels=4, spatial=16 (NCHW); values in (-1.5, 1.5) exercise the clamp
    x = jax.random.uniform(key, (2, 4, 16, 16), dtype=jnp.float32,
                           minval=-1.5, maxval=1.5)

    out = atanh_pallas(x, eps=1e-8)
    out = jax.block_until_ready(out)

    # pure-JAX reference (same semantics as the PyTorch module)
    ref = jnp.arctanh(jnp.clip(x, -1.0 + 1e-8, 1.0 - 1e-8))
    assert out.shape == x.shape and out.dtype == x.dtype
    assert bool(jnp.allclose(out, ref, atol=1e-4, rtol=1e-4))
    print("KERNEL_OK")
</pallas_src>

<mosaic_0001>
module attributes {stable_mosaic.version = 11 : i64} {
  func.func @_atanh_kernel(%arg0: i32, %arg1: memref<8x256xf32, #tpu.memory_space<vmem>>, %arg2: memref<8x256xf32, #tpu.memory_space<vmem>>) attributes {dimension_semantics = [#tpu.dimension_semantics<parallel>], iteration_bounds = array<i64: 1>, scalar_prefetch = 0 : i64, scratch_operands = 0 : i64, tpu.core_type = #tpu.core_type<tc>, window_params = [{transform_indices = @transform_0, window_bounds = array<i64: 8, 256>}, {transform_indices = @transform_1, window_bounds = array<i64: 8, 256>}]} {
    %c0 = arith.constant 0 : index
    %c0_0 = arith.constant 0 : index
    %0 = vector.load %arg1[%c0, %c0_0] : memref<8x256xf32, #tpu.memory_space<vmem>>, vector<8x256xf32>
    %cst = arith.constant -1.000000e+00 : f32
    %cst_1 = arith.constant 1.000000e+00 : f32
    %1 = vector.broadcast %cst : f32 to vector<8x256xf32>
    %2 = arith.maximumf %1, %0 : vector<8x256xf32>
    %3 = vector.broadcast %cst_1 : f32 to vector<8x256xf32>
    %4 = arith.minimumf %3, %2 : vector<8x256xf32>
    %cst_2 = arith.constant 1.000000e+00 : f32
    %5 = vector.broadcast %cst_2 : f32 to vector<8x256xf32>
    %6 = arith.addf %5, %4 : vector<8x256xf32>
    %7 = math.log %6 : vector<8x256xf32>
    %cst_3 = arith.constant 1.000000e+00 : f32
    %8 = vector.broadcast %cst_3 : f32 to vector<8x256xf32>
    %9 = arith.subf %8, %4 : vector<8x256xf32>
    %10 = math.log %9 : vector<8x256xf32>
    %11 = arith.subf %7, %10 : vector<8x256xf32>
    %cst_4 = arith.constant 5.000000e-01 : f32
    %12 = vector.broadcast %cst_4 : f32 to vector<8x256xf32>
    %13 = arith.mulf %12, %11 : vector<8x256xf32>
    %c0_5 = arith.constant 0 : index
    %c0_6 = arith.constant 0 : index
    %14 = vector.load %arg2[%c0_5, %c0_6] : memref<8x256xf32, #tpu.memory_space<vmem>>, vector<8x256xf32>
    tpu.vector_store %arg2[%c0_5, %c0_6], %13 {strides = array<i32>} : memref<8x256xf32, #tpu.memory_space<vmem>>, vector<8x256xf32>,
    return
  }
  func.func @transform_0(%arg0: i32) -> (i32, i32) {
    %c0_i32 = arith.constant 0 : i32
    %c0_i32_0 = arith.constant 0 : i32
    return %arg0, %c0_i32 : i32, i32
  }
  func.func @transform_1(%arg0: i32) -> (i32, i32) {
    %c0_i32 = arith.constant 0 : i32
    %c0_i32_0 = arith.constant 0 : i32
    return %arg0, %c0_i32 : i32, i32
  }
}

</mosaic_0001>

<llo_original>
// kernel: tpu_custom_call.1
$region0: #{tpu_custom_call.1}
  #allocation0 [shape = 'u32[]', space=smem, size = 0x4, offset = 0x4, fixed_abs, tag = 'smem constant byte address 0x4 - core index']
  #allocation1 [shape = 'u32[144,128]{1,0:T(1,128)}', space=vmem, size = 0x12000, scoped, tag = 'internal scratch']
  %s0 = inlined_call_operand.hbm [shape: f32[8,256], index: 0, kind: input, shape index: {}]
  %s1 = inlined_call_operand.hbm [shape: f32[8,256], index: 1, kind: output, shape index: {}]
  %s2 = sld [smem:[#allocation0]]
  $region18: #{tpu_custom_call.1} parent=0
    _
  %s4 = ssub.s32 1, %s2
  %s5 = scalar_select 0, %s4, %s2
  $region1: #{tpu_custom_call.1} parent=0
    #allocation2 [shape = 'u8[8192]{0}', space=vmem, size = 0x2000, scoped, tag = 'input window, operand 0, single buffered']
    #allocation3 [shape = 's32[1]{0}', space=sflag, size = 0x4, scoped, tag = 'scoped memory for tpu_custom_call.1']
    #allocation4 [shape = 's32[1]{0}', space=sflag, size = 0x4, scoped, tag = 'scoped memory for tpu_custom_call.1']
    #allocation5 [shape = 'u8[8192]{0}', space=vmem, size = 0x2000, scoped, tag = 'output window, operand 0, single buffered']
    %6 = vsyncpa [#allocation3], 0
    %7 = vsyncpa [#allocation4], 0
    // Predicated region
    $region2: #{tpu_custom_call.1} parent=1 // pred_check
      _
    $region3: #{tpu_custom_call.1} parent=1 // pred_check_branch
      %9 = sbr.rel (0) target = $region5
    $region4: #{tpu_custom_call.1} parent=1 // pred_region
      %s11 = ssub.s32 256, 256
      %12 = vsyncadd [#allocation3], %s11
      %s14 = sshll.u32 [#allocation2], 4
      %s15 = int_to_ptr.vmem [resolvable:$true] %s14
      %17 = dma.hbm_to_vmem [thread:$0]  %s0, 256, %s15, [#allocation3]
    $region5: #{tpu_custom_call.1} parent=1 // pred_fallthru
      _
    // Predicated region
    $region6: #{tpu_custom_call.1} parent=1 // pred_check
      _
    $region7: #{tpu_custom_call.1} parent=1 // pred_check_branch
      %19 = sbr.rel (0) target = $region9
    $region8: #{tpu_custom_call.1} parent=1 // pred_region
      %20 = dma.done [#allocation3], 256
    $region9: #{tpu_custom_call.1} parent=1 // pred_fallthru
      _
    %v21 = vld [vmem:[#allocation2] sm:$0xff]
    %v22 = vld [vmem:[#allocation2 + $0x8] sm:$0xff]
    %v23 = vmax.f32 %v21, -1.0
    %v24 = vmax.f32 %v22, -1.0
    %v25 = vmin.f32 %v23, 1.0
    %v26 = vmin.f32 %v24, 1.0
    %v27 = vadd.f32 %v25, 1.0
    %v28 = vadd.f32 %v26, 1.0
    %v29 = vlog2.pop %v27
    %v30 = vmul.f32 %v29, 0.6931472
    %v31 = vlog2.pop %v28
    %v32 = vmul.f32 %v31, 0.6931472
    %v33 = vsub.f32 1.0, %v25
    %v34 = vsub.f32 1.0, %v26
    %v35 = vlog2.pop %v33
    %v36 = vmul.f32 %v35, 0.6931472
    %v37 = vlog2.pop %v34
    %v38 = vmul.f32 %v37, 0.6931472
    %v39 = vsub.f32 %v30, %v36
    %v40 = vsub.f32 %v32, %v38
    %v41 = vmul.f32 %v39, 0.5
    %v42 = vmul.f32 %v40, 0.5
    %43 = vst [vmem:[#allocation5] sm:$0xff] %v41
    %44 = vst [vmem:[#allocation5 + $0x8] sm:$0xff] %v42
    // Predicated region
    $region10: #{tpu_custom_call.1} parent=1 // pred_check
      _
    $region11: #{tpu_custom_call.1} parent=1 // pred_check_branch
      %46 = sbr.rel (0) target = $region13
    $region12: #{tpu_custom_call.1} parent=1 // pred_region
      %s48 = ssub.s32 256, 256
      %49 = vsyncadd [#allocation4], %s48
      %s51 = sshll.u32 [#allocation5], 4
      %s52 = int_to_ptr.vmem [resolvable:$true] %s51
      %54 = dma.vmem_to_hbm [thread:$0]  %s52, 256, %s1, [#allocation4]
    $region13: #{tpu_custom_call.1} parent=1 // pred_fallthru
      _
    // Predicated region
    $region14: #{tpu_custom_call.1} parent=1 // pred_check
      _
    $region15: #{tpu_custom_call.1} parent=1 // pred_check_branch
      %56 = sbr.rel (0) target = $region17
    $region16: #{tpu_custom_call.1} parent=1 // pred_region
      %57 = dma.done [#allocation4], 256
    $region17: #{tpu_custom_call.1} parent=1 // pred_fallthru
      _
    %58 = vsyncpa [#allocation3], 1
    %59 = vsyncpa [#allocation4], 1

</llo_original>
